<compile_context>
chip_gen: v7x
topology: tpu7x:2x2x1
jax: 0.10.0
libtpu: 0.0.40
codegen_flags: <defaults>
</compile_context>

<pallas_src>
import jax
import jax.numpy as jnp
from jax.experimental import pallas as pl
from jax.experimental.pallas import tpu as pltpu


def _round_up(x, m):
    return ((x + m - 1) // m) * m


def make_gin_fused_kernel(n_pad, d_max, h_pad):
    """Fused n_layers GIN forward. Grid axis 0 = layer index (sequential)."""

    def kernel(adj_ref, x0_ref, pmat_ref, w1_ref, b1_ref, w2_ref, b2_ref,
               xout_ref, pool_ref, h_ref):
        layer = pl.program_id(0)
        last = pl.num_programs(0) - 1

        # Layer 0: load the (padded) input features into the resident activation.
        @pl.when(layer == 0)
        def _init():
            h_ref[...] = x0_ref[...].astype(jnp.float32)

        # Aggregate: (A + I) @ X  ==  (1 + eps) * x_i + sum_{j -> i} x_j  (eps = 0).
        # bf16 operands (adjacency entries are exact small ints), f32 accumulate.
        h_in = h_ref[...].astype(jnp.bfloat16)
        agg = jnp.dot(adj_ref[...], h_in, preferred_element_type=jnp.float32)

        # GINConv MLP: Linear -> ReLU -> Linear  (biases added in f32).
        h1 = jnp.dot(agg.astype(jnp.bfloat16), w1_ref[0],
                     preferred_element_type=jnp.float32) + b1_ref[0]
        h1 = jnp.maximum(h1, 0.0)
        o = jnp.dot(h1.astype(jnp.bfloat16), w2_ref[0],
                    preferred_element_type=jnp.float32) + b2_ref[0]
        # Outer activation (self.act = ReLU), bn=False.
        o = jnp.maximum(o, 0.0)

        # Carry the activation for the next layer (zero-pad up to d_max columns so
        # no stale columns survive when feat_dim padding is wider than hidden).
        if d_max == h_pad:
            h_ref[...] = o
        else:
            h_ref[:, :h_pad] = o
            h_ref[:, h_pad:] = jnp.zeros((n_pad, d_max - h_pad), jnp.float32)

        # global_add_pool for this layer: P @ X (padded graph rows / node cols are 0).
        # Output block index walks the lane axis -> one lane-dense [Gp, L*Hp] slab.
        pool_ref[...] = jnp.dot(pmat_ref[...], o.astype(jnp.bfloat16),
                                preferred_element_type=jnp.float32)

        # Node output: only the last layer's value is needed (finalize pattern).
        @pl.when(layer == last)
        def _finalize():
            xout_ref[...] = o

    return kernel


def gin_forward(x, edge_index, batch, params, n_graphs):
    """Fused GIN forward. Returns (global_rep [G, L*H], x_out [N, H])."""
    n_nodes, feat_dim = x.shape
    n_layers = len(params)
    hidden_dim = params[0][2].shape[1]

    n_pad = _round_up(n_nodes, 128)           # lane dim of adj / pmat, sublane of x
    f_pad = _round_up(feat_dim, 128)
    h_pad = _round_up(hidden_dim, 128)
    d_max = max(f_pad, h_pad)                 # width of the resident activation
    g_pad = _round_up(n_graphs, 8)

    # Dense adjacency with self loops folded in: (A + I), zero for padded nodes so
    # garbage in padded rows never reaches real nodes.
    src, dst = edge_index[0], edge_index[1]
    adj = jnp.zeros((n_nodes, n_nodes), jnp.float32).at[dst, src].add(1.0)
    adj = adj + jnp.eye(n_nodes, dtype=jnp.float32)
    adj_p = jnp.zeros((n_pad, n_pad), jnp.bfloat16).at[:n_nodes, :n_nodes].set(
        adj.astype(jnp.bfloat16))

    # One-hot pooling matrix [G, N]; padded graph rows / node columns are zero.
    pmat = (jnp.arange(n_graphs)[:, None] == batch[None, :]).astype(jnp.bfloat16)
    pmat_p = jnp.zeros((g_pad, n_pad), jnp.bfloat16).at[:n_graphs, :n_nodes].set(pmat)

    # Padded input features (full resident-activation width so the carry scratch
    # is fully initialized at layer 0 -> no uninitialized VMEM ever flows forward).
    x0_p = jnp.zeros((n_pad, d_max), jnp.float32).at[:n_nodes, :feat_dim].set(
        x.astype(jnp.float32))

    # Stack per-layer weights (zero-padded) so one grid axis walks the layers.
    w1s = jnp.zeros((n_layers, d_max, h_pad), jnp.bfloat16)
    b1s = jnp.zeros((n_layers, 1, h_pad), jnp.float32)
    w2s = jnp.zeros((n_layers, h_pad, h_pad), jnp.bfloat16)
    b2s = jnp.zeros((n_layers, 1, h_pad), jnp.float32)
    for i, (w1, b1, w2, b2) in enumerate(params):
        w1s = w1s.at[i, :w1.shape[0], :w1.shape[1]].set(w1.astype(jnp.bfloat16))
        b1s = b1s.at[i, :, :b1.shape[1]].set(b1)
        w2s = w2s.at[i, :w2.shape[0], :w2.shape[1]].set(w2.astype(jnp.bfloat16))
        b2s = b2s.at[i, :, :b2.shape[1]].set(b2)

    kernel = make_gin_fused_kernel(n_pad, d_max, h_pad)

    grid_spec = pltpu.PrefetchScalarGridSpec(
        num_scalar_prefetch=0,
        grid=(n_layers,),
        in_specs=[
            pl.BlockSpec((n_pad, n_pad), lambda l: (0, 0)),        # adj (+I), resident
            pl.BlockSpec((n_pad, d_max), lambda l: (0, 0)),        # x0, resident
            pl.BlockSpec((g_pad, n_pad), lambda l: (0, 0)),        # pooling matrix, resident
            pl.BlockSpec((1, d_max, h_pad), lambda l: (l, 0, 0)),  # W1[l]
            pl.BlockSpec((1, 1, h_pad), lambda l: (l, 0, 0)),      # b1[l]
            pl.BlockSpec((1, h_pad, h_pad), lambda l: (l, 0, 0)),  # W2[l]
            pl.BlockSpec((1, 1, h_pad), lambda l: (l, 0, 0)),      # b2[l]
        ],
        out_specs=(
            pl.BlockSpec((n_pad, h_pad), lambda l: (0, 0)),        # final node features
            pl.BlockSpec((g_pad, h_pad), lambda l: (0, l)),        # pooled slab [Gp, L*Hp]
        ),
        scratch_shapes=[pltpu.VMEM((n_pad, d_max), jnp.float32)],  # resident activation
    )

    xout, pooled = pl.pallas_call(
        kernel,
        out_shape=(
            jax.ShapeDtypeStruct((n_pad, h_pad), jnp.float32),
            jax.ShapeDtypeStruct((g_pad, n_layers * h_pad), jnp.float32),
        ),
        grid_spec=grid_spec,
        compiler_params=pltpu.CompilerParams(
            dimension_semantics=("arbitrary",),   # layers are sequential
        ),
    )(adj_p, x0_p, pmat_p, w1s, b1s, w2s, b2s)

    x_final = xout[:n_nodes, :hidden_dim]
    # concat per-layer pooled features along feature axis: (G, L*H)
    global_rep = pooled[:n_graphs].reshape(n_graphs, n_layers, h_pad)[
        :, :, :hidden_dim].reshape(n_graphs, n_layers * hidden_dim)
    return global_rep, x_final


# ------------------------------ parameter init ------------------------------

def xavier_uniform(key, fan_in, fan_out):
    limit = jnp.sqrt(6.0 / (fan_in + fan_out))
    return jax.random.uniform(key, (fan_in, fan_out), jnp.float32, -limit, limit)


def init_gin_params(key, feat_dim, hidden_dim, n_layers):
    params = []
    for i in range(n_layers):
        start_dim = hidden_dim if i else feat_dim
        key, k1, k2 = jax.random.split(key, 3)
        w1 = xavier_uniform(k1, start_dim, hidden_dim)
        b1 = jnp.zeros((1, hidden_dim), jnp.float32)
        w2 = xavier_uniform(k2, hidden_dim, hidden_dim)
        b2 = jnp.zeros((1, hidden_dim), jnp.float32)
        params.append((w1, b1, w2, b2))
    return params


# ------------------------------ pure-JAX reference --------------------------

def gin_forward_ref(x, edge_index, batch, params, n_graphs):
    n_nodes = x.shape[0]
    src, dst = edge_index[0], edge_index[1]
    adj = jnp.zeros((n_nodes, n_nodes), jnp.float32).at[dst, src].add(1.0)
    adj = adj + jnp.eye(n_nodes, dtype=jnp.float32)
    pmat = (jnp.arange(n_graphs)[:, None] == batch[None, :]).astype(jnp.float32)
    h = x.astype(jnp.float32)
    pooled = []
    for (w1, b1, w2, b2) in params:
        agg = adj @ h
        t = jnp.maximum(agg @ w1 + b1, 0.0)
        h = jnp.maximum(t @ w2 + b2, 0.0)
        pooled.append(pmat @ h)
    return jnp.concatenate(pooled, axis=1), h


# ------------------------------------ demo ----------------------------------

if __name__ == "__main__":
    feat_dim, hidden_dim, n_layers = 8, 32, 3
    n_graphs, nodes_per_graph = 2, 8
    n_nodes = n_graphs * nodes_per_graph

    key = jax.random.PRNGKey(0)
    key, kx = jax.random.split(key)
    x = jax.random.normal(kx, (n_nodes, feat_dim), jnp.float32)

    # Two ring graphs of 8 nodes each, bidirectional edges.
    srcs, dsts = [], []
    for g in range(n_graphs):
        for k in range(nodes_per_graph):
            a = g * nodes_per_graph + k
            b = g * nodes_per_graph + (k + 1) % nodes_per_graph
            srcs += [a, b]
            dsts += [b, a]
    edge_index = jnp.array([srcs, dsts], dtype=jnp.int32)   # [2, E]
    batch = jnp.repeat(jnp.arange(n_graphs, dtype=jnp.int32), nodes_per_graph)  # [N]

    params = init_gin_params(key, feat_dim, hidden_dim, n_layers)

    global_rep, x_out = gin_forward(x, edge_index, batch, params, n_graphs)
    jax.block_until_ready((global_rep, x_out))

    assert global_rep.shape == (n_graphs, n_layers * hidden_dim)
    assert x_out.shape == (n_nodes, hidden_dim)

    # Correctness vs. f32 reference (kernel uses bf16 MXU inputs -> loose tolerance).
    ref_rep, ref_x = gin_forward_ref(x, edge_index, batch, params, n_graphs)
    rep_err = jnp.max(jnp.abs(global_rep - ref_rep)) / (jnp.max(jnp.abs(ref_rep)) + 1e-6)
    x_err = jnp.max(jnp.abs(x_out - ref_x)) / (jnp.max(jnp.abs(ref_x)) + 1e-6)
    assert float(rep_err) < 5e-2, f"pooled mismatch: {float(rep_err)}"
    assert float(x_err) < 5e-2, f"node-feature mismatch: {float(x_err)}"

    print("KERNEL_OK")
</pallas_src>

<mosaic_0001>
module attributes {stable_mosaic.version = 11 : i64} {
  func.func @kernel(%arg0: i32, %arg1: memref<128x128xbf16, #tpu.memory_space<vmem>>, %arg2: memref<128x128xf32, #tpu.memory_space<vmem>>, %arg3: memref<8x128xbf16, #tpu.memory_space<vmem>>, %arg4: memref<1x128x128xbf16, #tpu.memory_space<vmem>>, %arg5: memref<1x1x128xf32, #tpu.memory_space<vmem>>, %arg6: memref<1x128x128xbf16, #tpu.memory_space<vmem>>, %arg7: memref<1x1x128xf32, #tpu.memory_space<vmem>>, %arg8: memref<128x128xf32, #tpu.memory_space<vmem>>, %arg9: memref<8x128xf32, #tpu.memory_space<vmem>>, %arg10: memref<128x128xf32, #tpu.memory_space<vmem>>) attributes {dimension_semantics = [#tpu.dimension_semantics<arbitrary>], iteration_bounds = array<i64: 3>, scalar_prefetch = 0 : i64, scratch_operands = 1 : i64, tpu.core_type = #tpu.core_type<tc>, window_params = [{pipeline_mode = #tpu.pipeline_mode<synchronous>, transform_indices = @transform_0, window_bounds = array<i64: 128, 128>}, {pipeline_mode = #tpu.pipeline_mode<synchronous>, transform_indices = @transform_1, window_bounds = array<i64: 128, 128>}, {pipeline_mode = #tpu.pipeline_mode<synchronous>, transform_indices = @transform_2, window_bounds = array<i64: 8, 128>}, {transform_indices = @transform_3, window_bounds = array<i64: 1, 128, 128>}, {transform_indices = @transform_4, window_bounds = array<i64: 1, 1, 128>}, {transform_indices = @transform_5, window_bounds = array<i64: 1, 128, 128>}, {transform_indices = @transform_6, window_bounds = array<i64: 1, 1, 128>}, {pipeline_mode = #tpu.pipeline_mode<synchronous>, transform_indices = @transform_7, window_bounds = array<i64: 128, 128>}, {transform_indices = @transform_8, window_bounds = array<i64: 8, 128>}]} {
    %c0_i32 = arith.constant 0 : i32
    %0 = arith.cmpi eq, %arg0, %c0_i32 : i32
    %1 = arith.extui %0 : i1 to i32
    %c0_i32_0 = arith.constant 0 : i32
    %2 = arith.cmpi ne, %1, %c0_i32_0 : i32
    scf.if %2 {
      %c0_28 = arith.constant 0 : index
      %c0_29 = arith.constant 0 : index
      %35 = vector.load %arg2[%c0_28, %c0_29] : memref<128x128xf32, #tpu.memory_space<vmem>>, vector<128x128xf32>
      %c0_30 = arith.constant 0 : index
      %c0_31 = arith.constant 0 : index
      %36 = vector.load %arg10[%c0_30, %c0_31] : memref<128x128xf32, #tpu.memory_space<vmem>>, vector<128x128xf32>
      tpu.vector_store %arg10[%c0_30, %c0_31], %35 {strides = array<i32>} : memref<128x128xf32, #tpu.memory_space<vmem>>, vector<128x128xf32>,
    } else {
    }
    %c0 = arith.constant 0 : index
    %c0_1 = arith.constant 0 : index
    %3 = vector.load %arg10[%c0, %c0_1] : memref<128x128xf32, #tpu.memory_space<vmem>>, vector<128x128xf32>
    %4 = arith.truncf %3 : vector<128x128xf32> to vector<128x128xbf16>
    %c0_2 = arith.constant 0 : index
    %c0_3 = arith.constant 0 : index
    %5 = vector.load %arg1[%c0_2, %c0_3] : memref<128x128xbf16, #tpu.memory_space<vmem>>, vector<128x128xbf16>
    %cst = arith.constant dense<0.000000e+00> : vector<128x128xf32>
    %6 = tpu.matmul %5, %4, %cst {dimension_numbers = #tpu.dot_dimension_numbers<[1], [0], [0], [1], [0, 0, 1, 1], [], []>} : vector<128x128xbf16>, vector<128x128xbf16>, vector<128x128xf32> -> vector<128x128xf32>
    %7 = arith.truncf %6 : vector<128x128xf32> to vector<128x128xbf16>
    %c0_4 = arith.constant 0 : index
    %c0_5 = arith.constant 0 : index
    %c0_6 = arith.constant 0 : index
    %8 = vector.load %arg4[%c0_4, %c0_5, %c0_6] : memref<1x128x128xbf16, #tpu.memory_space<vmem>>, vector<1x128x128xbf16>
    %9 = vector.shape_cast %8 : vector<1x128x128xbf16> to vector<128x128xbf16>
    %cst_7 = arith.constant dense<0.000000e+00> : vector<128x128xf32>
    %10 = tpu.matmul %7, %9, %cst_7 {dimension_numbers = #tpu.dot_dimension_numbers<[1], [0], [0], [1], [0, 0, 1, 1], [], []>} : vector<128x128xbf16>, vector<128x128xbf16>, vector<128x128xf32> -> vector<128x128xf32>
    %c0_8 = arith.constant 0 : index
    %c0_9 = arith.constant 0 : index
    %c0_10 = arith.constant 0 : index
    %11 = vector.load %arg5[%c0_8, %c0_9, %c0_10] : memref<1x1x128xf32, #tpu.memory_space<vmem>>, vector<1x1x128xf32>
    %12 = vector.shape_cast %11 : vector<1x1x128xf32> to vector<1x128xf32>
    %13 = vector.broadcast %12 : vector<1x128xf32> to vector<128x128xf32>
    %14 = arith.addf %10, %13 : vector<128x128xf32>
    %cst_11 = arith.constant 0.000000e+00 : f32
    %15 = vector.broadcast %cst_11 : f32 to vector<128x128xf32>
    %16 = arith.maximumf %14, %15 : vector<128x128xf32>
    %17 = arith.truncf %16 : vector<128x128xf32> to vector<128x128xbf16>
    %c0_12 = arith.constant 0 : index
    %c0_13 = arith.constant 0 : index
    %c0_14 = arith.constant 0 : index
    %18 = vector.load %arg6[%c0_12, %c0_13, %c0_14] : memref<1x128x128xbf16, #tpu.memory_space<vmem>>, vector<1x128x128xbf16>
    %19 = vector.shape_cast %18 : vector<1x128x128xbf16> to vector<128x128xbf16>
    %cst_15 = arith.constant dense<0.000000e+00> : vector<128x128xf32>
    %20 = tpu.matmul %17, %19, %cst_15 {dimension_numbers = #tpu.dot_dimension_numbers<[1], [0], [0], [1], [0, 0, 1, 1], [], []>} : vector<128x128xbf16>, vector<128x128xbf16>, vector<128x128xf32> -> vector<128x128xf32>
    %c0_16 = arith.constant 0 : index
    %c0_17 = arith.constant 0 : index
    %c0_18 = arith.constant 0 : index
    %21 = vector.load %arg7[%c0_16, %c0_17, %c0_18] : memref<1x1x128xf32, #tpu.memory_space<vmem>>, vector<1x1x128xf32>
    %22 = vector.shape_cast %21 : vector<1x1x128xf32> to vector<1x128xf32>
    %23 = vector.broadcast %22 : vector<1x128xf32> to vector<128x128xf32>
    %24 = arith.addf %20, %23 : vector<128x128xf32>
    %cst_19 = arith.constant 0.000000e+00 : f32
    %25 = vector.broadcast %cst_19 : f32 to vector<128x128xf32>
    %26 = arith.maximumf %24, %25 : vector<128x128xf32>
    %c0_20 = arith.constant 0 : index
    %c0_21 = arith.constant 0 : index
    %27 = vector.load %arg10[%c0_20, %c0_21] : memref<128x128xf32, #tpu.memory_space<vmem>>, vector<128x128xf32>
    tpu.vector_store %arg10[%c0_20, %c0_21], %26 {strides = array<i32>} : memref<128x128xf32, #tpu.memory_space<vmem>>, vector<128x128xf32>,
    %c0_22 = arith.constant 0 : index
    %c0_23 = arith.constant 0 : index
    %28 = vector.load %arg3[%c0_22, %c0_23] : memref<8x128xbf16, #tpu.memory_space<vmem>>, vector<8x128xbf16>
    %29 = arith.truncf %26 : vector<128x128xf32> to vector<128x128xbf16>
    %cst_24 = arith.constant dense<0.000000e+00> : vector<8x128xf32>
    %30 = tpu.matmul %28, %29, %cst_24 {dimension_numbers = #tpu.dot_dimension_numbers<[1], [0], [0], [1], [0, 0, 1, 1], [], []>} : vector<8x128xbf16>, vector<128x128xbf16>, vector<8x128xf32> -> vector<8x128xf32>
    %c0_25 = arith.constant 0 : index
    %c0_26 = arith.constant 0 : index
    %31 = vector.load %arg9[%c0_25, %c0_26] : memref<8x128xf32, #tpu.memory_space<vmem>>, vector<8x128xf32>
    tpu.vector_store %arg9[%c0_25, %c0_26], %30 {strides = array<i32>} : memref<8x128xf32, #tpu.memory_space<vmem>>, vector<8x128xf32>,
    %c2_i32 = arith.constant 2 : i32
    %32 = arith.cmpi eq, %arg0, %c2_i32 : i32
    %33 = arith.extui %32 : i1 to i32
    %c0_i32_27 = arith.constant 0 : i32
    %34 = arith.cmpi ne, %33, %c0_i32_27 : i32
    scf.if %34 {
      %c0_28 = arith.constant 0 : index
      %c0_29 = arith.constant 0 : index
      %35 = vector.load %arg8[%c0_28, %c0_29] : memref<128x128xf32, #tpu.memory_space<vmem>>, vector<128x128xf32>
      tpu.vector_store %arg8[%c0_28, %c0_29], %26 {strides = array<i32>} : memref<128x128xf32, #tpu.memory_space<vmem>>, vector<128x128xf32>,
    } else {
    }
    return
  }
  func.func @transform_0(%arg0: i32) -> (i32, i32) {
    %c0_i32 = arith.constant 0 : i32
    %c0_i32_0 = arith.constant 0 : i32
    %c0_i32_1 = arith.constant 0 : i32
    return %c0_i32, %c0_i32_0 : i32, i32
  }
  func.func @transform_1(%arg0: i32) -> (i32, i32) {
    %c0_i32 = arith.constant 0 : i32
    %c0_i32_0 = arith.constant 0 : i32
    %c0_i32_1 = arith.constant 0 : i32
    return %c0_i32, %c0_i32_0 : i32, i32
  }
  func.func @transform_2(%arg0: i32) -> (i32, i32) {
    %c0_i32 = arith.constant 0 : i32
    %c0_i32_0 = arith.constant 0 : i32
    %c0_i32_1 = arith.constant 0 : i32
    return %c0_i32, %c0_i32_0 : i32, i32
  }
  func.func @transform_3(%arg0: i32) -> (i32, i32, i32) {
    %c0_i32 = arith.constant 0 : i32
    %c0_i32_0 = arith.constant 0 : i32
    %c0_i32_1 = arith.constant 0 : i32
    return %arg0, %c0_i32, %c0_i32_0 : i32, i32, i32
  }
  func.func @transform_4(%arg0: i32) -> (i32, i32, i32) {
    %c0_i32 = arith.constant 0 : i32
    %c0_i32_0 = arith.constant 0 : i32
    %c0_i32_1 = arith.constant 0 : i32
    return %arg0, %c0_i32, %c0_i32_0 : i32, i32, i32
  }
  func.func @transform_5(%arg0: i32) -> (i32, i32, i32) {
    %c0_i32 = arith.constant 0 : i32
    %c0_i32_0 = arith.constant 0 : i32
    %c0_i32_1 = arith.constant 0 : i32
    return %arg0, %c0_i32, %c0_i32_0 : i32, i32, i32
  }
  func.func @transform_6(%arg0: i32) -> (i32, i32, i32) {
    %c0_i32 = arith.constant 0 : i32
    %c0_i32_0 = arith.constant 0 : i32
    %c0_i32_1 = arith.constant 0 : i32
    return %arg0, %c0_i32, %c0_i32_0 : i32, i32, i32
  }
  func.func @transform_7(%arg0: i32) -> (i32, i32) {
    %c0_i32 = arith.constant 0 : i32
    %c0_i32_0 = arith.constant 0 : i32
    %c0_i32_1 = arith.constant 0 : i32
    return %c0_i32, %c0_i32_0 : i32, i32
  }
  func.func @transform_8(%arg0: i32) -> (i32, i32) {
    %c0_i32 = arith.constant 0 : i32
    %c0_i32_0 = arith.constant 0 : i32
    return %c0_i32, %arg0 : i32, i32
  }
}

</mosaic_0001>

<llo_original>
// kernel: tpu_custom_call.1
$region0: #{tpu_custom_call.1}
  #allocation0 [shape = 'u32[]', space=smem, size = 0x4, offset = 0x4, fixed_abs, tag = 'smem constant byte address 0x4 - core index']
  #allocation1 [shape = 'u32[144,128]{1,0:T(1,128)}', space=vmem, size = 0x12000, scoped, tag = 'internal scratch']
  #allocation2 [shape = 'f32[128,128]{1,0:T(8,128)}', space=vmem, size = 0x10000, scoped, tag = 'scratch operand']
  %s0 = inlined_call_operand.hbm [shape: bf16[128,128], index: 0, kind: input, shape index: {}]
  %s1 = inlined_call_operand.hbm [shape: f32[128,128], index: 1, kind: input, shape index: {}]
  %s2 = inlined_call_operand.vmem [shape: bf16[8,128], index: 2, kind: input, shape index: {}]
  %s3 = inlined_call_operand.hbm [shape: bf16[3,128,128], index: 3, kind: input, shape index: {}]
  %s4 = inlined_call_operand.vmem [shape: f32[3,1,128], index: 4, kind: input, shape index: {}]
  %s5 = inlined_call_operand.hbm [shape: bf16[3,128,128], index: 5, kind: input, shape index: {}]
  %s6 = inlined_call_operand.vmem [shape: f32[3,1,128], index: 6, kind: input, shape index: {}]
  %s7 = inlined_call_operand.hbm [shape: f32[128,128], index: 7, kind: output, shape index: {0}]
  %s8 = inlined_call_operand.hbm [shape: f32[8,384], index: 8, kind: output, shape index: {1}]
  %9 = xla_tuple %s7, %s8
  %s10 = sld [smem:[#allocation0]]
  $region93: #{tpu_custom_call.1} parent=0
    _
  %s12 = ssub.s32 1, %s10
  %s13 = scalar_select 0, %s12, %s10
  $region1: #{tpu_custom_call.1} parent=0
    #allocation3 [shape = 'u8[32768]{0}', space=vmem, size = 0x8000, scoped, tag = 'input window, operand 0, single buffered']
    #allocation4 [shape = 's32[2]{0}', space=sflag, size = 0x8, scoped, tag = 'scoped memory for tpu_custom_call.1']
    #allocation5 [shape = 's32[2]{0}', space=sflag, size = 0x8, scoped, tag = 'scoped memory for tpu_custom_call.1']
    #allocation6 [shape = 'u8[65536]{0}', space=vmem, size = 0x10000, scoped, tag = 'input window, operand 1, single buffered']
    #allocation7 [shape = 's32[1]{0}', space=sflag, size = 0x4, scoped, tag = 'scoped memory for tpu_custom_call.1']
    #allocation8 [shape = 'u8[65536]{0}', space=vmem, size = 0x10000, scoped, tag = 'input window, operand 3']
    #allocation9 [shape = 'u8[65536]{0}', space=vmem, size = 0x10000, scoped, tag = 'input window, operand 5']
    #allocation10 [shape = 'u8[65536]{0}', space=vmem, size = 0x10000, scoped, tag = 'output window, operand 0, single buffered']
    #allocation11 [shape = 'u8[8192]{0}', space=vmem, size = 0x2000, scoped, tag = 'output window, operand 1']
    #allocation12 [shape = 's32[2]{0}', space=sflag, size = 0x8, scoped, tag = 'scoped memory for tpu_custom_call.1']
    %14 = vsyncpa [#allocation4], 0
    %15 = vsyncpa [#allocation7], 0
    %16 = vsyncpa [#allocation5], 0
    %17 = vsyncpa [#allocation12], 0
    %s18 = scalar_lea.sflag [#allocation12], 1
    %19 = vsyncpa %s18, 0
    loop: start=0, step=1, limit=5
    $region2: #{tpu_custom_call.1} parent=1 // loop_pre_header
      _
    $region3: #{tpu_custom_call.1} parent=1 // loop_header
      %s21 = sphi 0, %s25
      %p22 = scmp.ge.s32.totalorder %s21, 5
      %s29 = sphi 0, %s29
      %s31 = sphi 0, %s29
      %s32 = sphi 0, %s31
      %s46 = sphi 0, %s32
      %s50 = sphi 0, %s50
      %s52 = sphi 0, %s50
      %s53 = sphi 0, %s52
      %s67 = sphi 0, %s53
      %s71 = sphi 0, %s71
      %s73 = sphi 0, %s71
      %s74 = sphi 0, %s73
      %s88 = sphi 0, %s74
      %s94 = sphi 0, %s96
      %s97 = sphi 0, %s94
      %s98 = sphi 0, %s97
      %s114 = sphi 0, %s98
      %s120 = sphi 0, %s122
      %s123 = sphi 0, %s120
      %s124 = sphi 0, %s123
      %s140 = sphi 0, %s124
      %s146 = sphi 0, %s148
      %s149 = sphi 0, %s146
      %s150 = sphi 0, %s149
      %s166 = sphi 0, %s150
      %s172 = sphi 0, %s174
      %s175 = sphi 0, %s172
      %s176 = sphi 0, %s175
      %s192 = sphi 0, %s176
      %s196 = sphi 0, %s196
      %s198 = sphi 0, %s196
      %s199 = sphi 0, %s198
      %s213 = sphi 0, %s199
      %s219 = sphi 0, %s221
      %s222 = sphi 0, %s219
      %s223 = sphi 0, %s222
      %s239 = sphi 0, %s223
    $region4: #{tpu_custom_call.1} parent=1 // loop_header_branch
      %24 = sbr.rel (%p22) target = $region8
    $region5: #{tpu_custom_call.1} parent=1 // loop_body
      %s26 = ssub.s32 %s21, 1
      %s27 = ssub.s32 %s21, 2
      %s28 = sadd.s32 %s21, 1
      %s30 = sadd.s32 %s29, 1
      %p33 = scmp.eq.s32.totalorder %s21, 2
      %p34 = scmp.ne.s32.totalorder %s29, %s31
      %p35 = scmp.eq.s32.totalorder %s21, 0
      %p36 = por %p34, %p35
      %p37 = scmp.ne.s32.totalorder %s29, %s31
      %p38 = scmp.eq.s32.totalorder %s26, 2
      %p39 = por %p37, %p38
      %p40 = scmp.ne.s32.totalorder %s31, %s32
      %p41 = scmp.eq.s32.totalorder %s26, 0
      %p42 = por %p40, %p41
      %p43 = scmp.ne.s32.totalorder %s31, %s32
      %p44 = scmp.eq.s32.totalorder %s27, 2
      %p45 = por %p43, %p44
      %p47 = scmp.ne.s32.totalorder %s32, %s46
      %p48 = scmp.eq.s32.totalorder %s27, 0
      %p49 = por %p47, %p48
      %s51 = sadd.s32 %s50, 1
      %p54 = scmp.eq.s32.totalorder %s21, 2
      %p55 = scmp.ne.s32.totalorder %s50, %s52
      %p56 = scmp.eq.s32.totalorder %s21, 0
      %p57 = por %p55, %p56
      %p58 = scmp.ne.s32.totalorder %s50, %s52
      %p59 = scmp.eq.s32.totalorder %s26, 2
      %p60 = por %p58, %p59
      %p61 = scmp.ne.s32.totalorder %s52, %s53
      %p62 = scmp.eq.s32.totalorder %s26, 0
      %p63 = por %p61, %p62
      %p64 = scmp.ne.s32.totalorder %s52, %s53
      %p65 = scmp.eq.s32.totalorder %s27, 2
      %p66 = por %p64, %p65
      %p68 = scmp.ne.s32.totalorder %s53, %s67
      %p69 = scmp.eq.s32.totalorder %s27, 0
      %p70 = por %p68, %p69
      %s72 = sadd.s32 %s71, 1
      %p75 = scmp.eq.s32.totalorder %s21, 2
      %p76 = scmp.ne.s32.totalorder %s71, %s73
      %p77 = scmp.eq.s32.totalorder %s21, 0
      %p78 = por %p76, %p77
      %p79 = scmp.ne.s32.totalorder %s71, %s73
      %p80 = scmp.eq.s32.totalorder %s26, 2
      %p81 = por %p79, %p80
      %p82 = scmp.ne.s32.totalorder %s73, %s74
      %p83 = scmp.eq.s32.totalorder %s26, 0
      %p84 = por %p82, %p83
      %p85 = scmp.ne.s32.totalorder %s73, %s74
      %p86 = scmp.eq.s32.totalorder %s27, 2
      %p87 = por %p85, %p86
      %p89 = scmp.ne.s32.totalorder %s74, %s88
      %p90 = scmp.eq.s32.totalorder %s27, 0
      %p91 = por %p89, %p90
      %s92 = ssub.s32 %s21, %s28
      %p93 = scmp.eq.s32.totalorder %s92, 0
      %s95 = sadd.s32 %s94, 1
      %s96 = scalar_select %p93, %s94, %s95
      %p99 = pneg %p93
      %p100 = scmp.eq.s32.totalorder %s21, 2
      %p101 = por %p99, %p100
      %p102 = scmp.ne.s32.totalorder %s94, %s97
      %p103 = scmp.eq.s32.totalorder %s21, 0
      %p104 = por %p102, %p103
      %p105 = scmp.ne.s32.totalorder %s94, %s97
      %p106 = scmp.eq.s32.totalorder %s26, 2
      %p107 = por %p105, %p106
      %p108 = scmp.ne.s32.totalorder %s97, %s98
      %p109 = scmp.eq.s32.totalorder %s26, 0
      %p110 = por %p108, %p109
      %p111 = scmp.ne.s32.totalorder %s97, %s98
      %p112 = scmp.eq.s32.totalorder %s27, 2
      %p113 = por %p111, %p112
      %p115 = scmp.ne.s32.totalorder %s98, %s114
      %p116 = scmp.eq.s32.totalorder %s27, 0
      %p117 = por %p115, %p116
      %s118 = ssub.s32 %s21, %s28
      %p119 = scmp.eq.s32.totalorder %s118, 0
      %s121 = sadd.s32 %s120, 1
      %s122 = scalar_select %p119, %s120, %s121
      %p125 = pneg %p119
      %p126 = scmp.eq.s32.totalorder %s21, 2
      %p127 = por %p125, %p126
      %p128 = scmp.ne.s32.totalorder %s120, %s123
      %p129 = scmp.eq.s32.totalorder %s21, 0
      %p130 = por %p128, %p129
      %p131 = scmp.ne.s32.totalorder %s120, %s123
      %p132 = scmp.eq.s32.totalorder %s26, 2
      %p133 = por %p131, %p132
      %p134 = scmp.ne.s32.totalorder %s123, %s124
      %p135 = scmp.eq.s32.totalorder %s26, 0
      %p136 = por %p134, %p135
      %p137 = scmp.ne.s32.totalorder %s123, %s124
      %p138 = scmp.eq.s32.totalorder %s27, 2
      %p139 = por %p137, %p138
      %p141 = scmp.ne.s32.totalorder %s124, %s140
      %p142 = scmp.eq.s32.totalorder %s27, 0
      %p143 = por %p141, %p142
      %s144 = ssub.s32 %s21, %s28
      %p145 = scmp.eq.s32.totalorder %s144, 0
      %s147 = sadd.s32 %s146, 1
      %s148 = scalar_select %p145, %s146, %s147
      %p151 = pneg %p145
      %p152 = scmp.eq.s32.totalorder %s21, 2
      %p153 = por %p151, %p152
      %p154 = scmp.ne.s32.totalorder %s146, %s149
      %p155 = scmp.eq.s32.totalorder %s21, 0
      %p156 = por %p154, %p155
      %p157 = scmp.ne.s32.totalorder %s146, %s149
      %p158 = scmp.eq.s32.totalorder %s26, 2
      %p159 = por %p157, %p158
      %p160 = scmp.ne.s32.totalorder %s149, %s150
      %p161 = scmp.eq.s32.totalorder %s26, 0
      %p162 = por %p160, %p161
      %p163 = scmp.ne.s32.totalorder %s149, %s150
      %p164 = scmp.eq.s32.totalorder %s27, 2
      %p165 = por %p163, %p164
      %p167 = scmp.ne.s32.totalorder %s150, %s166
      %p168 = scmp.eq.s32.totalorder %s27, 0
      %p169 = por %p167, %p168
      %s170 = ssub.s32 %s21, %s28
      %p171 = scmp.eq.s32.totalorder %s170, 0
      %s173 = sadd.s32 %s172, 1
      %s174 = scalar_select %p171, %s172, %s173
      %p177 = pneg %p171
      %p178 = scmp.eq.s32.totalorder %s21, 2
      %p179 = por %p177, %p178
      %p180 = scmp.ne.s32.totalorder %s172, %s175
      %p181 = scmp.eq.s32.totalorder %s21, 0
      %p182 = por %p180, %p181
      %p183 = scmp.ne.s32.totalorder %s172, %s175
      %p184 = scmp.eq.s32.totalorder %s26, 2
      %p185 = por %p183, %p184
      %p186 = scmp.ne.s32.totalorder %s175, %s176
      %p187 = scmp.eq.s32.totalorder %s26, 0
      %p188 = por %p186, %p187
      %p189 = scmp.ne.s32.totalorder %s175, %s176
      %p190 = scmp.eq.s32.totalorder %s27, 2
      %p191 = por %p189, %p190
      %p193 = scmp.ne.s32.totalorder %s176, %s192
      %p194 = scmp.eq.s32.totalorder %s27, 0
      %p195 = por %p193, %p194
      %s197 = sadd.s32 %s196, 1
      %p200 = scmp.eq.s32.totalorder %s21, 2
      %p201 = scmp.ne.s32.totalorder %s196, %s198
      %p202 = scmp.eq.s32.totalorder %s21, 0
      %p203 = por %p201, %p202
      %p204 = scmp.ne.s32.totalorder %s196, %s198
      %p205 = scmp.eq.s32.totalorder %s26, 2
      %p206 = por %p204, %p205
      %p207 = scmp.ne.s32.totalorder %s198, %s199
      %p208 = scmp.eq.s32.totalorder %s26, 0
      %p209 = por %p207, %p208
      %p210 = scmp.ne.s32.totalorder %s198, %s199
      %p211 = scmp.eq.s32.totalorder %s27, 2
      %p212 = por %p210, %p211
      %p214 = scmp.ne.s32.totalorder %s199, %s213
      %p215 = scmp.eq.s32.totalorder %s27, 0
      %p216 = por %p214, %p215
      %s217 = ssub.s32 %s21, %s28
      %p218 = scmp.eq.s32.totalorder %s217, 0
      %s220 = sadd.s32 %s219, 1
      %s221 = scalar_select %p218, %s219, %s220
      %p224 = pneg %p218
      %p225 = scmp.eq.s32.totalorder %s21, 2
      %p226 = por %p224, %p225
      %p227 = scmp.ne.s32.totalorder %s219, %s222
      %p228 = scmp.eq.s32.totalorder %s21, 0
      %p229 = por %p227, %p228
      %p230 = scmp.ne.s32.totalorder %s219, %s222
      %p231 = scmp.eq.s32.totalorder %s26, 2
      %p232 = por %p230, %p231
      %p233 = scmp.ne.s32.totalorder %s222, %s223
      %p234 = scmp.eq.s32.totalorder %s26, 0
      %p235 = por %p233, %p234
      %p236 = scmp.ne.s32.totalorder %s222, %s223
      %p237 = scmp.eq.s32.totalorder %s27, 2
      %p238 = por %p236, %p237
      %p240 = scmp.ne.s32.totalorder %s223, %s239
      %p241 = scmp.eq.s32.totalorder %s27, 0
      %p242 = por %p240, %p241
      %p243 = scmp.le.s32.totalorder 1, %s21
      %p244 = scmp.lt.s32.totalorder %s21, 4
      %p245 = pnand %p243, %p244
      %p246 = pneg %p245
      // Predicated region
      $region9: #{tpu_custom_call.1} parent=5 // pred_check
        _
      $region10: #{tpu_custom_call.1} parent=5 // pred_check_branch
        %248 = sbr.rel (%p245) target = $region12
      $region11: #{tpu_custom_call.1} parent=5 // pred_region
        %s249 = ssub.s32 %s21, 1
        // Predicated region
        $region13: #{tpu_custom_call.1} parent=11 // pred_check
          %p250 = pneg %p42
        $region14: #{tpu_custom_call.1} parent=11 // pred_check_branch
          %252 = sbr.rel (%p250) target = $region16
        $region15: #{tpu_custom_call.1} parent=11 // pred_region
          %s254 = ssub.s32 1024, 1024
          %255 = vsyncadd [#allocation4], %s254
          %s256 = sshll.u32 [#allocation3], 4
          %s257 = int_to_ptr.vmem [resolvable:$true] %s256
          %262 = dma.hbm_to_vmem [thread:$0]  %s0, 1024, %s257, [#allocation4], 64, 64, 4
        $region16: #{tpu_custom_call.1} parent=11 // pred_fallthru
          _
        // Predicated region
        $region17: #{tpu_custom_call.1} parent=11 // pred_check
          %p263 = pneg %p63
        $region18: #{tpu_custom_call.1} parent=11 // pred_check_branch
          %265 = sbr.rel (%p263) target = $region20
        $region19: #{tpu_custom_call.1} parent=11 // pred_region
          %s267 = ssub.s32 2048, 2048
          %268 = vsyncadd [#allocation7], %s267
          %s269 = sshll.u32 [#allocation6], 4
          %s270 = int_to_ptr.vmem [resolvable:$true] %s269
          %275 = dma.hbm_to_vmem [thread:$0]  %s1, 2048, %s270, [#allocation7], 128, 128, 8
        $region20: #{tpu_custom_call.1} parent=11 // pred_fallthru
          _
        // Predicated region
        $region21: #{tpu_custom_call.1} parent=11 // pred_check
          %p276 = pneg %p84
        $region22: #{tpu_custom_call.1} parent=11 // pred_check_branch
          %278 = sbr.rel (%p276) target = $region24
        $region23: #{tpu_custom_call.1} parent=11 // pred_region
          _
        $region24: #{tpu_custom_call.1} parent=11 // pred_fallthru
          _
      $region12: #{tpu_custom_call.1} parent=5 // pred_fallthru
        _
      %p279 = scmp.lt.s32.totalorder %s21, 3
      // Predicated region
      $region25: #{tpu_custom_call.1} parent=5 // pred_check
        %p280 = pneg %p279
      $region26: #{tpu_custom_call.1} parent=5 // pred_check_branch
        %282 = sbr.rel (%p280) target = $region28
      $region27: #{tpu_custom_call.1} parent=5 // pred_region
        // Predicated region
        $region29: #{tpu_custom_call.1} parent=27 // pred_check
          %p283 = pneg %p104
        $region30: #{tpu_custom_call.1} parent=27 // pred_check_branch
          %285 = sbr.rel (%p283) target = $region32
        $region31: #{tpu_custom_call.1} parent=27 // pred_region
          %s286 = sand.u32 %s21, 1
          %s287 = scalar_lea.sflag [#allocation4], %s286
          %s288 = sand.u32 %s94, 1
          %s289 = smul.addr %s288, 64
          %s290 = scalar_lea.vmem [#allocation8], %s289
          %s292 = ssub.s32 1024, 1024
          %293 = vsyncadd %s287, %s292
          %s294 = smul.addr %s21, 16
          %s295 = smul.addr %s294, 64
          %s296 = scalar_lea.hbm %s3, %s295
          %s297 = sshll.u32 %s290, 4
          %s298 = int_to_ptr.vmem [resolvable:$true] %s297
          %303 = dma.hbm_to_vmem [thread:$0]  %s296, 1024, %s298, %s287, 64, 64, 4
        $region32: #{tpu_custom_call.1} parent=27 // pred_fallthru
          _
        // Predicated region
        $region33: #{tpu_custom_call.1} parent=27 // pred_check
          %p304 = pneg %p130
        $region34: #{tpu_custom_call.1} parent=27 // pred_check_branch
          %306 = sbr.rel (%p304) target = $region36
        $region35: #{tpu_custom_call.1} parent=27 // pred_region
          %p307 = scmp.lt.s32.totalorder %s21, 2
          %s308 = scalar_select %p307, %s21, 2
          %s309 = scalar_lea.vmem %s4, %s308
        $region36: #{tpu_custom_call.1} parent=27 // pred_fallthru
          _
        // Predicated region
        $region37: #{tpu_custom_call.1} parent=27 // pred_check
          %p310 = pneg %p156
        $region38: #{tpu_custom_call.1} parent=27 // pred_check_branch
          %312 = sbr.rel (%p310) target = $region40
        $region39: #{tpu_custom_call.1} parent=27 // pred_region
          %s313 = sand.u32 %s21, 1
          %s314 = scalar_lea.sflag [#allocation4], %s313
          %s315 = sand.u32 %s146, 1
          %s316 = smul.addr %s315, 64
          %s317 = scalar_lea.vmem [#allocation9], %s316
          %s319 = ssub.s32 1024, 1024
          %320 = vsyncadd %s314, %s319
          %s321 = smul.addr %s21, 16
          %s322 = smul.addr %s321, 64
          %s323 = scalar_lea.hbm %s5, %s322
          %s324 = sshll.u32 %s317, 4
          %s325 = int_to_ptr.vmem [resolvable:$true] %s324
          %330 = dma.hbm_to_vmem [thread:$0]  %s323, 1024, %s325, %s314, 64, 64, 4
        $region40: #{tpu_custom_call.1} parent=27 // pred_fallthru
          _
        // Predicated region
        $region41: #{tpu_custom_call.1} parent=27 // pred_check
          %p331 = pneg %p182
        $region42: #{tpu_custom_call.1} parent=27 // pred_check_branch
          %333 = sbr.rel (%p331) target = $region44
        $region43: #{tpu_custom_call.1} parent=27 // pred_region
          %p334 = scmp.lt.s32.totalorder %s21, 2
          %s335 = scalar_select %p334, %s21, 2
          %s336 = scalar_lea.vmem %s6, %s335
        $region44: #{tpu_custom_call.1} parent=27 // pred_fallthru
          _
      $region28: #{tpu_custom_call.1} parent=5 // pred_fallthru
        _
      %p337 = scmp.le.s32.totalorder 1, %s21
      %p338 = scmp.lt.s32.totalorder %s21, 4
      %p339 = pnand %p337, %p338
      %p340 = pneg %p339
      // Predicated region
      $region45: #{tpu_custom_call.1} parent=5 // pred_check
        _
      $region46: #{tpu_custom_call.1} parent=5 // pred_check_branch
        %342 = sbr.rel (%p339) target = $region48
      $region47: #{tpu_custom_call.1} parent=5 // pred_region
        %s343 = ssub.s32 %s21, 1
        // Predicated region
        $region49: #{tpu_custom_call.1} parent=47 // pred_check
          %p344 = pneg %p42
        $region50: #{tpu_custom_call.1} parent=47 // pred_check_branch
          %346 = sbr.rel (%p344) target = $region52
        $region51: #{tpu_custom_call.1} parent=47 // pred_region
          %347 = dma.done [#allocation4], 1024
        $region52: #{tpu_custom_call.1} parent=47 // pred_fallthru
          _
        // Predicated region
        $region53: #{tpu_custom_call.1} parent=47 // pred_check
          %p348 = pneg %p63
        $region54: #{tpu_custom_call.1} parent=47 // pred_check_branch
          %350 = sbr.rel (%p348) target = $region56
        $region55: #{tpu_custom_call.1} parent=47 // pred_region
          %351 = dma.done [#allocation7], 2048
        $region56: #{tpu_custom_call.1} parent=47 // pred_fallthru
          _
        %s352 = sand.u32 %s26, 1
        %s353 = scalar_lea.sflag [#allocation4], %s352
        %s354 = sand.u32 %s97, 1
        %s355 = smul.addr %s354, 64
        %s356 = scalar_lea.vmem [#allocation8], %s355
        // Predicated region
        $region57: #{tpu_custom_call.1} parent=47 // pred_check
          %p357 = pneg %p110
        $region58: #{tpu_custom_call.1} parent=47 // pred_check_branch
          %359 = sbr.rel (%p357) target = $region60
        $region59: #{tpu_custom_call.1} parent=47 // pred_region
          %360 = dma.done %s353, 1024
        $region60: #{tpu_custom_call.1} parent=47 // pred_fallthru
          _
        %s361 = sand.u32 %s26, 1
        %s362 = scalar_lea.sflag [#allocation4], %s361
        %s363 = sand.u32 %s149, 1
        %s364 = smul.addr %s363, 64
        %s365 = scalar_lea.vmem [#allocation9], %s364
        // Predicated region
        $region61: #{tpu_custom_call.1} parent=47 // pred_check
          %p366 = pneg %p162
        $region62: #{tpu_custom_call.1} parent=47 // pred_check_branch
          %368 = sbr.rel (%p366) target = $region64
        $region63: #{tpu_custom_call.1} parent=47 // pred_region
          %369 = dma.done %s362, 1024
        $region64: #{tpu_custom_call.1} parent=47 // pred_fallthru
          _
        %p370 = pneg %p42
        %p371 = pneg %p39
        %p372 = pneg %p63
        %p373 = pneg %p60
        %p374 = pneg %p84
        %p375 = pneg %p81
        %s376 = sand.u32 %s26, 1
        %s377 = scalar_lea.sflag [#allocation4], %s376
        %s378 = sand.u32 %s97, 1
        %s379 = smul.addr %s378, 64
        %s380 = scalar_lea.vmem [#allocation8], %s379
        %p381 = pneg %p110
        %p382 = pneg %p107
        %p383 = scmp.lt.s32.totalorder %s26, 2
        %s384 = scalar_select %p383, %s26, 2
        %s385 = scalar_lea.vmem %s4, %s384
        %p386 = pneg %p136
        %p387 = pneg %p133
        %s388 = sand.u32 %s26, 1
        %s389 = scalar_lea.sflag [#allocation4], %s388
        %s390 = sand.u32 %s149, 1
        %s391 = smul.addr %s390, 64
        %s392 = scalar_lea.vmem [#allocation9], %s391
        %p393 = pneg %p162
        %p394 = pneg %p159
        %p395 = scmp.lt.s32.totalorder %s26, 2
        %s396 = scalar_select %p395, %s26, 2
        %s397 = scalar_lea.vmem %s6, %s396
        %p398 = pneg %p188
        %p399 = pneg %p185
        %p400 = pneg %p209
        %p401 = pneg %p206
        %p402 = pneg %p235
        %p403 = pneg %p232
        %s404 = sand.u32 %s222, 1
        %s405 = scalar_lea.sflag [#allocation12], %s404
        %s406 = sand.u32 %s222, 1
        %s407 = smul.addr %s406, 8
        %s408 = scalar_lea.vmem [#allocation11], %s407
        %p409 = scmp.lt.s32.totalorder %s26, 2
        %s410 = scalar_select %p409, %s26, 2
        %s411 = scalar_lea.vmem %s4, %s410
        %p412 = scmp.lt.s32.totalorder %s26, 2
        %s413 = scalar_select %p412, %s26, 2
        %s414 = scalar_lea.vmem %s6, %s413
        %p416 = scmp.eq.s32.totalorder %s26, 0
        // Predicated region
        $region65: #{tpu_custom_call.1} parent=47 // pred_check
          %p417 = pneg %p416
        $region66: #{tpu_custom_call.1} parent=47 // pred_check_branch
          %419 = sbr.rel (%p417) target = $region68
        $region67: #{tpu_custom_call.1} parent=47 // pred_region
          %v420 = vld [vmem:[#allocation6] sm:$0xff]
          %v421 = vld [vmem:[#allocation6 + $0x8] sm:$0xff]
          %v422 = vld [vmem:[#allocation6 + $0x10] sm:$0xff]
          %v423 = vld [vmem:[#allocation6 + $0x18] sm:$0xff]
          %v424 = vld [vmem:[#allocation6 + $0x20] sm:$0xff]
          %v425 = vld [vmem:[#allocation6 + $0x28] sm:$0xff]
          %v426 = vld [vmem:[#allocation6 + $0x30] sm:$0xff]
          %v427 = vld [vmem:[#allocation6 + $0x38] sm:$0xff]
          %v428 = vld [vmem:[#allocation6 + $0x40] sm:$0xff]
          %v429 = vld [vmem:[#allocation6 + $0x48] sm:$0xff]
          %v430 = vld [vmem:[#allocation6 + $0x50] sm:$0xff]
          %v431 = vld [vmem:[#allocation6 + $0x58] sm:$0xff]
          %v432 = vld [vmem:[#allocation6 + $0x60] sm:$0xff]
          %v433 = vld [vmem:[#allocation6 + $0x68] sm:$0xff]
          %v434 = vld [vmem:[#allocation6 + $0x70] sm:$0xff]
          %v435 = vld [vmem:[#allocation6 + $0x78] sm:$0xff]
          %436 = vst [vmem:[#allocation2] sm:$0xff] %v420
          %437 = vst [vmem:[#allocation2 + $0x8] sm:$0xff] %v421
          %438 = vst [vmem:[#allocation2 + $0x10] sm:$0xff] %v422
          %439 = vst [vmem:[#allocation2 + $0x18] sm:$0xff] %v423
          %440 = vst [vmem:[#allocation2 + $0x20] sm:$0xff] %v424
          %441 = vst [vmem:[#allocation2 + $0x28] sm:$0xff] %v425
          %442 = vst [vmem:[#allocation2 + $0x30] sm:$0xff] %v426
          %443 = vst [vmem:[#allocation2 + $0x38] sm:$0xff] %v427
          %444 = vst [vmem:[#allocation2 + $0x40] sm:$0xff] %v428
          %445 = vst [vmem:[#allocation2 + $0x48] sm:$0xff] %v429
          %446 = vst [vmem:[#allocation2 + $0x50] sm:$0xff] %v430
          %447 = vst [vmem:[#allocation2 + $0x58] sm:$0xff] %v431
          %448 = vst [vmem:[#allocation2 + $0x60] sm:$0xff] %v432
          %449 = vst [vmem:[#allocation2 + $0x68] sm:$0xff] %v433
          %450 = vst [vmem:[#allocation2 + $0x70] sm:$0xff] %v434
          %451 = vst [vmem:[#allocation2 + $0x78] sm:$0xff] %v435
        $region68: #{tpu_custom_call.1} parent=47 // pred_fallthru
          _
        %v452 = vld [vmem:[#allocation2] sm:$0xff]
        %v453 = vld [vmem:[#allocation2 + $0x8] sm:$0xff]
        %v454 = vld [vmem:[#allocation2 + $0x10] sm:$0xff]
        %v455 = vld [vmem:[#allocation2 + $0x18] sm:$0xff]
        %v456 = vld [vmem:[#allocation2 + $0x20] sm:$0xff]
        %v457 = vld [vmem:[#allocation2 + $0x28] sm:$0xff]
        %v458 = vld [vmem:[#allocation2 + $0x30] sm:$0xff]
        %v459 = vld [vmem:[#allocation2 + $0x38] sm:$0xff]
        %v460 = vld [vmem:[#allocation2 + $0x40] sm:$0xff]
        %v461 = vld [vmem:[#allocation2 + $0x48] sm:$0xff]
        %v462 = vld [vmem:[#allocation2 + $0x50] sm:$0xff]
        %v463 = vld [vmem:[#allocation2 + $0x58] sm:$0xff]
        %v464 = vld [vmem:[#allocation2 + $0x60] sm:$0xff]
        %v465 = vld [vmem:[#allocation2 + $0x68] sm:$0xff]
        %v466 = vld [vmem:[#allocation2 + $0x70] sm:$0xff]
        %v467 = vld [vmem:[#allocation2 + $0x78] sm:$0xff]
        %v468 = vpack.c.bf16 %v453, %v452
        %v469 = vpack.c.bf16 %v455, %v454
        %v470 = vpack.c.bf16 %v457, %v456
        %v471 = vpack.c.bf16 %v459, %v458
        %v472 = vpack.c.bf16 %v461, %v460
        %v473 = vpack.c.bf16 %v463, %v462
        %v474 = vpack.c.bf16 %v465, %v464
        %v475 = vpack.c.bf16 %v467, %v466
        %v476 = vld [vmem:[#allocation3] sm:$0xf]
        %v477 = vld [vmem:[#allocation3 + $0x4] sm:$0xf]
        %v478 = vld [vmem:[#allocation3 + $0x8] sm:$0xf]
        %v479 = vld [vmem:[#allocation3 + $0xc] sm:$0xf]
        %v480 = vld [vmem:[#allocation3 + $0x10] sm:$0xf]
        %v481 = vld [vmem:[#allocation3 + $0x14] sm:$0xf]
        %v482 = vld [vmem:[#allocation3 + $0x18] sm:$0xf]
        %v483 = vld [vmem:[#allocation3 + $0x1c] sm:$0xf]
        %v484 = vld [vmem:[#allocation3 + $0x20] sm:$0xf]
        %v485 = vld [vmem:[#allocation3 + $0x24] sm:$0xf]
        %v486 = vld [vmem:[#allocation3 + $0x28] sm:$0xf]
        %v487 = vld [vmem:[#allocation3 + $0x2c] sm:$0xf]
        %v488 = vld [vmem:[#allocation3 + $0x30] sm:$0xf]
        %v489 = vld [vmem:[#allocation3 + $0x34] sm:$0xf]
        %v490 = vld [vmem:[#allocation3 + $0x38] sm:$0xf]
        %v491 = vld [vmem:[#allocation3 + $0x3c] sm:$0xf]
        %v508 = vunpack.c.l.b16 %v476
        %v509 = vunpack.c.l.b16 %v477
        %v510 = vunpack.c.l.b16 %v478
        %v511 = vunpack.c.l.b16 %v479
        %v512 = vunpack.c.l.b16 %v480
        %v513 = vunpack.c.l.b16 %v481
        %v514 = vunpack.c.l.b16 %v482
        %v515 = vunpack.c.l.b16 %v483
        %v516 = vunpack.c.l.b16 %v484
        %v517 = vunpack.c.l.b16 %v485
        %v518 = vunpack.c.l.b16 %v486
        %v519 = vunpack.c.l.b16 %v487
        %v520 = vunpack.c.l.b16 %v488
        %v521 = vunpack.c.l.b16 %v489
        %v522 = vunpack.c.l.b16 %v490
        %v523 = vunpack.c.l.b16 %v491
        %v524 = vpack.c.b16 %v509, %v508
        %v525 = vpack.c.b16 %v511, %v510
        %v526 = vpack.c.b16 %v513, %v512
        %v527 = vpack.c.b16 %v515, %v514
        %v528 = vpack.c.b16 %v517, %v516
        %v529 = vpack.c.b16 %v519, %v518
        %v530 = vpack.c.b16 %v521, %v520
        %v531 = vpack.c.b16 %v523, %v522
        %540 = vmatprep.subr.bf16.mxu0 0
        %541 = vmatpush1.bf16.msra.mxu0 %v468
        %542 = vmatprep.subr.bf16.mxu0 0
        %543 = vmatpush1.bf16.msra.mxu0 %v469
        %544 = vmatprep.subr.bf16.mxu0 0
        %545 = vmatpush1.bf16.msra.mxu0 %v470
        %546 = vmatprep.subr.bf16.mxu0 0
        %547 = vmatpush1.bf16.msra.mxu0 %v471
        %548 = vmatprep.subr.bf16.mxu0 0
        %549 = vmatpush1.bf16.msra.mxu0 %v472
        %550 = vmatprep.subr.bf16.mxu0 0
        %551 = vmatpush1.bf16.msra.mxu0 %v473
        %552 = vmatprep.subr.bf16.mxu0 0
        %553 = vmatpush1.bf16.msra.mxu0 %v474
        %554 = vmatprep.subr.bf16.mxu0 0
        %555 = vmatpush1.bf16.msra.mxu0 %v475
        %556 = vmatprep.subr.bf16.mxu0 0
        %557 = vmatpush1.bf16.msra.mxu0 0
        %558 = vmatprep.subr.bf16.mxu0 0
        %559 = vmatpush1.bf16.msra.mxu0 0
        %560 = vmatprep.subr.bf16.mxu0 0
        %561 = vmatpush1.bf16.msra.mxu0 0
        %562 = vmatprep.subr.bf16.mxu0 0
        %563 = vmatpush1.bf16.msra.mxu0 0
        %564 = vmatprep.subr.bf16.mxu0 0
        %565 = vmatpush1.bf16.msra.mxu0 0
        %566 = vmatprep.subr.bf16.mxu0 0
        %567 = vmatpush1.bf16.msra.mxu0 0
        %568 = vmatprep.subr.bf16.mxu0 0
        %569 = vmatpush1.bf16.msra.mxu0 0
        %570 = vmatprep.subr.bf16.mxu0 0
        %571 = vmatpush1.bf16.msra.mxu0 0
        %572 = vmatprep.mubr.bf16.mxu0 0
        %573 = vmatmul.mubr.bf16.gmra.mrb[0].mxu0 %v524
        %v574 = vpop.f32.mrb[0].mxu0
        %v575 = vadd.f32 0.0, %v574
        %v576 = vpop.f32.mrb[0].mxu0
        %v577 = vpop.f32.mrb[0].mxu0
        %v578 = vadd.f32 0.0, %v577
        %v579 = vpop.f32.mrb[0].mxu0
        %580 = vmatprep.mubr.bf16.mxu0 0
        %581 = vmatmul.mubr.bf16.gmra.mrb[0].mxu0 %v525
        %v582 = vpop.f32.mrb[0].mxu0
        %v583 = vadd.f32 0.0, %v582
        %v584 = vpop.f32.mrb[0].mxu0
        %v585 = vpop.f32.mrb[0].mxu0
        %v586 = vadd.f32 0.0, %v585
        %v587 = vpop.f32.mrb[0].mxu0
        %588 = vmatprep.mubr.bf16.mxu0 0
        %589 = vmatmul.mubr.bf16.gmra.mrb[0].mxu0 %v526
        %v590 = vpop.f32.mrb[0].mxu0
        %v591 = vadd.f32 0.0, %v590
        %v592 = vpop.f32.mrb[0].mxu0
        %v593 = vpop.f32.mrb[0].mxu0
        %v594 = vadd.f32 0.0, %v593
        %v595 = vpop.f32.mrb[0].mxu0
        %596 = vmatprep.mubr.bf16.mxu0 0
        %597 = vmatmul.mubr.bf16.gmra.mrb[0].mxu0 %v527
        %v598 = vpop.f32.mrb[0].mxu0
        %v599 = vadd.f32 0.0, %v598
        %v600 = vpop.f32.mrb[0].mxu0
        %v601 = vpop.f32.mrb[0].mxu0
        %v602 = vadd.f32 0.0, %v601
        %v603 = vpop.f32.mrb[0].mxu0
        %604 = vmatprep.mubr.bf16.mxu0 0
        %605 = vmatmul.mubr.bf16.gmra.mrb[0].mxu0 %v528
        %v606 = vpop.f32.mrb[0].mxu0
        %v607 = vadd.f32 0.0, %v606
        %v608 = vpop.f32.mrb[0].mxu0
        %v609 = vpop.f32.mrb[0].mxu0
        %v610 = vadd.f32 0.0, %v609
        %v611 = vpop.f32.mrb[0].mxu0
        %612 = vmatprep.mubr.bf16.mxu0 0
        %613 = vmatmul.mubr.bf16.gmra.mrb[0].mxu0 %v529
        %v614 = vpop.f32.mrb[0].mxu0
        %v615 = vadd.f32 0.0, %v614
        %v616 = vpop.f32.mrb[0].mxu0
        %v617 = vpop.f32.mrb[0].mxu0
        %v618 = vadd.f32 0.0, %v617
        %v619 = vpop.f32.mrb[0].mxu0
        %620 = vmatprep.mubr.bf16.mxu0 0
        %621 = vmatmul.mubr.bf16.gmra.mrb[0].mxu0 %v530
        %v622 = vpop.f32.mrb[0].mxu0
        %v623 = vadd.f32 0.0, %v622
        %v624 = vpop.f32.mrb[0].mxu0
        %v625 = vpop.f32.mrb[0].mxu0
        %v626 = vadd.f32 0.0, %v625
        %v627 = vpop.f32.mrb[0].mxu0
        %628 = vmatprep.mubr.bf16.mxu0 0
        %629 = vmatmul.mubr.bf16.gmra.mrb[0].mxu0 %v531
        %v630 = vpop.f32.mrb[0].mxu0
        %v631 = vadd.f32 0.0, %v630
        %v632 = vpop.f32.mrb[0].mxu0
        %v633 = vpop.f32.mrb[0].mxu0
        %v634 = vadd.f32 0.0, %v633
        %v635 = vpop.f32.mrb[0].mxu0
        %636 = vdwg.mxu0
        %v637 = vpack.c.bf16 %v578, %v575
        %v638 = vpack.c.bf16 %v586, %v583
        %v639 = vpack.c.bf16 %v594, %v591
        %v640 = vpack.c.bf16 %v602, %v599
        %v641 = vpack.c.bf16 %v610, %v607
        %v642 = vpack.c.bf16 %v618, %v615
        %v643 = vpack.c.bf16 %v626, %v623
        %v644 = vpack.c.bf16 %v634, %v631
        %v645 = vld [vmem:[%s356] sm:$0xf]
        %v646 = vld [vmem:[%s356 + $0x4] sm:$0xf]
        %v647 = vld [vmem:[%s356 + $0x8] sm:$0xf]
        %v648 = vld [vmem:[%s356 + $0xc] sm:$0xf]
        %v649 = vld [vmem:[%s356 + $0x10] sm:$0xf]
        %v650 = vld [vmem:[%s356 + $0x14] sm:$0xf]
        %v651 = vld [vmem:[%s356 + $0x18] sm:$0xf]
        %v652 = vld [vmem:[%s356 + $0x1c] sm:$0xf]
        %v653 = vld [vmem:[%s356 + $0x20] sm:$0xf]
        %v654 = vld [vmem:[%s356 + $0x24] sm:$0xf]
        %v655 = vld [vmem:[%s356 + $0x28] sm:$0xf]
        %v656 = vld [vmem:[%s356 + $0x2c] sm:$0xf]
        %v657 = vld [vmem:[%s356 + $0x30] sm:$0xf]
        %v658 = vld [vmem:[%s356 + $0x34] sm:$0xf]
        %v659 = vld [vmem:[%s356 + $0x38] sm:$0xf]
        %v660 = vld [vmem:[%s356 + $0x3c] sm:$0xf]
        %v661 = vld [vmem:[%s411] sm:$0x1]
        %v663 = vlaneseq
        %v664 = vshrl.u32 %v663, 7
        %v665 = vsub.s32 0, %v664
        %v666 = vrot.slane %v661, %v665
        %v684 = vunpack.c.l.b16 %v645
        %v685 = vunpack.c.l.b16 %v646
        %v686 = vunpack.c.l.b16 %v647
        %v687 = vunpack.c.l.b16 %v648
        %v688 = vunpack.c.l.b16 %v649
        %v689 = vunpack.c.l.b16 %v650
        %v690 = vunpack.c.l.b16 %v651
        %v691 = vunpack.c.l.b16 %v652
        %v692 = vunpack.c.l.b16 %v653
        %v693 = vunpack.c.l.b16 %v654
        %v694 = vunpack.c.l.b16 %v655
        %v695 = vunpack.c.l.b16 %v656
        %v696 = vunpack.c.l.b16 %v657
        %v697 = vunpack.c.l.b16 %v658
        %v698 = vunpack.c.l.b16 %v659
        %v699 = vunpack.c.l.b16 %v660
        %v700 = vpack.c.b16 %v685, %v684
        %v701 = vpack.c.b16 %v687, %v686
        %v702 = vpack.c.b16 %v689, %v688
        %v703 = vpack.c.b16 %v691, %v690
        %v704 = vpack.c.b16 %v693, %v692
        %v705 = vpack.c.b16 %v695, %v694
        %v706 = vpack.c.b16 %v697, %v696
        %v707 = vpack.c.b16 %v699, %v698
        %716 = vmatprep.subr.bf16.mxu0 0
        %717 = vmatpush1.bf16.msra.mxu0 %v700
        %718 = vmatprep.subr.bf16.mxu0 0
        %719 = vmatpush1.bf16.msra.mxu0 %v701
        %720 = vmatprep.subr.bf16.mxu0 0
        %721 = vmatpush1.bf16.msra.mxu0 %v702
        %722 = vmatprep.subr.bf16.mxu0 0
        %723 = vmatpush1.bf16.msra.mxu0 %v703
        %724 = vmatprep.subr.bf16.mxu0 0
        %725 = vmatpush1.bf16.msra.mxu0 %v704
        %726 = vmatprep.subr.bf16.mxu0 0
        %727 = vmatpush1.bf16.msra.mxu0 %v705
        %728 = vmatprep.subr.bf16.mxu0 0
        %729 = vmatpush1.bf16.msra.mxu0 %v706
        %730 = vmatprep.subr.bf16.mxu0 0
        %731 = vmatpush1.bf16.msra.mxu0 %v707
        %732 = vmatprep.subr.bf16.mxu0 0
        %733 = vmatpush1.bf16.msra.mxu0 0
        %734 = vmatprep.subr.bf16.mxu0 0
        %735 = vmatpush1.bf16.msra.mxu0 0
        %736 = vmatprep.subr.bf16.mxu0 0
        %737 = vmatpush1.bf16.msra.mxu0 0
        %738 = vmatprep.subr.bf16.mxu0 0
        %739 = vmatpush1.bf16.msra.mxu0 0
        %740 = vmatprep.subr.bf16.mxu0 0
        %741 = vmatpush1.bf16.msra.mxu0 0
        %742 = vmatprep.subr.bf16.mxu0 0
        %743 = vmatpush1.bf16.msra.mxu0 0
        %744 = vmatprep.subr.bf16.mxu0 0
        %745 = vmatpush1.bf16.msra.mxu0 0
        %746 = vmatprep.subr.bf16.mxu0 0
        %747 = vmatpush1.bf16.msra.mxu0 0
        %748 = vmatprep.mubr.bf16.mxu0 0
        %749 = vmatmul.mubr.bf16.gmra.mrb[0].mxu0 %v637
        %v750 = vpop.f32.mrb[0].mxu0
        %v751 = vadd.f32 %v666, %v750
        %v752 = vpop.f32.mrb[0].mxu0
        %v753 = vpop.f32.mrb[0].mxu0
        %v754 = vadd.f32 %v666, %v753
        %v755 = vpop.f32.mrb[0].mxu0
        %756 = vmatprep.mubr.bf16.mxu0 0
        %757 = vmatmul.mubr.bf16.gmra.mrb[0].mxu0 %v638
        %v758 = vpop.f32.mrb[0].mxu0
        %v759 = vadd.f32 %v666, %v758
        %v760 = vpop.f32.mrb[0].mxu0
        %v761 = vpop.f32.mrb[0].mxu0
        %v762 = vadd.f32 %v666, %v761
        %v763 = vpop.f32.mrb[0].mxu0
        %764 = vmatprep.mubr.bf16.mxu0 0
        %765 = vmatmul.mubr.bf16.gmra.mrb[0].mxu0 %v639
        %v766 = vpop.f32.mrb[0].mxu0
        %v767 = vadd.f32 %v666, %v766
        %v768 = vpop.f32.mrb[0].mxu0
        %v769 = vpop.f32.mrb[0].mxu0
        %v770 = vadd.f32 %v666, %v769
        %v771 = vpop.f32.mrb[0].mxu0
        %772 = vmatprep.mubr.bf16.mxu0 0
        %773 = vmatmul.mubr.bf16.gmra.mrb[0].mxu0 %v640
        %v774 = vpop.f32.mrb[0].mxu0
        %v775 = vadd.f32 %v666, %v774
        %v776 = vpop.f32.mrb[0].mxu0
        %v777 = vpop.f32.mrb[0].mxu0
        %v778 = vadd.f32 %v666, %v777
        %v779 = vpop.f32.mrb[0].mxu0
        %780 = vmatprep.mubr.bf16.mxu0 0
        %781 = vmatmul.mubr.bf16.gmra.mrb[0].mxu0 %v641
        %v782 = vpop.f32.mrb[0].mxu0
        %v783 = vadd.f32 %v666, %v782
        %v784 = vpop.f32.mrb[0].mxu0
        %v785 = vpop.f32.mrb[0].mxu0
        %v786 = vadd.f32 %v666, %v785
        %v787 = vpop.f32.mrb[0].mxu0
        %788 = vmatprep.mubr.bf16.mxu0 0
        %789 = vmatmul.mubr.bf16.gmra.mrb[0].mxu0 %v642
        %v790 = vpop.f32.mrb[0].mxu0
        %v791 = vadd.f32 %v666, %v790
        %v792 = vpop.f32.mrb[0].mxu0
        %v793 = vpop.f32.mrb[0].mxu0
        %v794 = vadd.f32 %v666, %v793
        %v795 = vpop.f32.mrb[0].mxu0
        %796 = vmatprep.mubr.bf16.mxu0 0
        %797 = vmatmul.mubr.bf16.gmra.mrb[0].mxu0 %v643
        %v798 = vpop.f32.mrb[0].mxu0
        %v799 = vadd.f32 %v666, %v798
        %v800 = vpop.f32.mrb[0].mxu0
        %v801 = vpop.f32.mrb[0].mxu0
        %v802 = vadd.f32 %v666, %v801
        %v803 = vpop.f32.mrb[0].mxu0
        %804 = vmatprep.mubr.bf16.mxu0 0
        %805 = vmatmul.mubr.bf16.gmra.mrb[0].mxu0 %v644
        %v806 = vpop.f32.mrb[0].mxu0
        %v807 = vadd.f32 %v666, %v806
        %v808 = vpop.f32.mrb[0].mxu0
        %v809 = vpop.f32.mrb[0].mxu0
        %v810 = vadd.f32 %v666, %v809
        %v811 = vpop.f32.mrb[0].mxu0
        %812 = vdwg.mxu0
        %v813 = vmax.f32 %v751, 0.0
        %v814 = vmax.f32 %v754, 0.0
        %v815 = vmax.f32 %v759, 0.0
        %v816 = vmax.f32 %v762, 0.0
        %v817 = vmax.f32 %v767, 0.0
        %v818 = vmax.f32 %v770, 0.0
        %v819 = vmax.f32 %v775, 0.0
        %v820 = vmax.f32 %v778, 0.0
        %v821 = vmax.f32 %v783, 0.0
        %v822 = vmax.f32 %v786, 0.0
        %v823 = vmax.f32 %v791, 0.0
        %v824 = vmax.f32 %v794, 0.0
        %v825 = vmax.f32 %v799, 0.0
        %v826 = vmax.f32 %v802, 0.0
        %v827 = vmax.f32 %v807, 0.0
        %v828 = vmax.f32 %v810, 0.0
        %v829 = vpack.c.bf16 %v814, %v813
        %v830 = vpack.c.bf16 %v816, %v815
        %v831 = vpack.c.bf16 %v818, %v817
        %v832 = vpack.c.bf16 %v820, %v819
        %v833 = vpack.c.bf16 %v822, %v821
        %v834 = vpack.c.bf16 %v824, %v823
        %v835 = vpack.c.bf16 %v826, %v825
        %v836 = vpack.c.bf16 %v828, %v827
        %v837 = vld [vmem:[%s365] sm:$0xf]
        %v838 = vld [vmem:[%s365 + $0x4] sm:$0xf]
        %v839 = vld [vmem:[%s365 + $0x8] sm:$0xf]
        %v840 = vld [vmem:[%s365 + $0xc] sm:$0xf]
        %v841 = vld [vmem:[%s365 + $0x10] sm:$0xf]
        %v842 = vld [vmem:[%s365 + $0x14] sm:$0xf]
        %v843 = vld [vmem:[%s365 + $0x18] sm:$0xf]
        %v844 = vld [vmem:[%s365 + $0x1c] sm:$0xf]
        %v845 = vld [vmem:[%s365 + $0x20] sm:$0xf]
        %v846 = vld [vmem:[%s365 + $0x24] sm:$0xf]
        %v847 = vld [vmem:[%s365 + $0x28] sm:$0xf]
        %v848 = vld [vmem:[%s365 + $0x2c] sm:$0xf]
        %v849 = vld [vmem:[%s365 + $0x30] sm:$0xf]
        %v850 = vld [vmem:[%s365 + $0x34] sm:$0xf]
        %v851 = vld [vmem:[%s365 + $0x38] sm:$0xf]
        %v852 = vld [vmem:[%s365 + $0x3c] sm:$0xf]
        %v853 = vld [vmem:[%s414] sm:$0x1]
        %v855 = vlaneseq
        %v856 = vshrl.u32 %v855, 7
        %v857 = vsub.s32 0, %v856
        %v858 = vrot.slane %v853, %v857
        %v876 = vunpack.c.l.b16 %v837
        %v877 = vunpack.c.l.b16 %v838
        %v878 = vunpack.c.l.b16 %v839
        %v879 = vunpack.c.l.b16 %v840
        %v880 = vunpack.c.l.b16 %v841
        %v881 = vunpack.c.l.b16 %v842
        %v882 = vunpack.c.l.b16 %v843
        %v883 = vunpack.c.l.b16 %v844
        %v884 = vunpack.c.l.b16 %v845
        %v885 = vunpack.c.l.b16 %v846
        %v886 = vunpack.c.l.b16 %v847
        %v887 = vunpack.c.l.b16 %v848
        %v888 = vunpack.c.l.b16 %v849
        %v889 = vunpack.c.l.b16 %v850
        %v890 = vunpack.c.l.b16 %v851
        %v891 = vunpack.c.l.b16 %v852
        %v892 = vpack.c.b16 %v877, %v876
        %v893 = vpack.c.b16 %v879, %v878
        %v894 = vpack.c.b16 %v881, %v880
        %v895 = vpack.c.b16 %v883, %v882
        %v896 = vpack.c.b16 %v885, %v884
        %v897 = vpack.c.b16 %v887, %v886
        %v898 = vpack.c.b16 %v889, %v888
        %v899 = vpack.c.b16 %v891, %v890
        %908 = vmatprep.subr.bf16.mxu0 0
        %909 = vmatpush1.bf16.msra.mxu0 %v892
        %910 = vmatprep.subr.bf16.mxu0 0
        %911 = vmatpush1.bf16.msra.mxu0 %v893
        %912 = vmatprep.subr.bf16.mxu0 0
        %913 = vmatpush1.bf16.msra.mxu0 %v894
        %914 = vmatprep.subr.bf16.mxu0 0
        %915 = vmatpush1.bf16.msra.mxu0 %v895
        %916 = vmatprep.subr.bf16.mxu0 0
        %917 = vmatpush1.bf16.msra.mxu0 %v896
        %918 = vmatprep.subr.bf16.mxu0 0
        %919 = vmatpush1.bf16.msra.mxu0 %v897
        %920 = vmatprep.subr.bf16.mxu0 0
        %921 = vmatpush1.bf16.msra.mxu0 %v898
        %922 = vmatprep.subr.bf16.mxu0 0
        %923 = vmatpush1.bf16.msra.mxu0 %v899
        %924 = vmatprep.subr.bf16.mxu0 0
        %925 = vmatpush1.bf16.msra.mxu0 0
        %926 = vmatprep.subr.bf16.mxu0 0
        %927 = vmatpush1.bf16.msra.mxu0 0
        %928 = vmatprep.subr.bf16.mxu0 0
        %929 = vmatpush1.bf16.msra.mxu0 0
        %930 = vmatprep.subr.bf16.mxu0 0
        %931 = vmatpush1.bf16.msra.mxu0 0
        %932 = vmatprep.subr.bf16.mxu0 0
        %933 = vmatpush1.bf16.msra.mxu0 0
        %934 = vmatprep.subr.bf16.mxu0 0
        %935 = vmatpush1.bf16.msra.mxu0 0
        %936 = vmatprep.subr.bf16.mxu0 0
        %937 = vmatpush1.bf16.msra.mxu0 0
        %938 = vmatprep.subr.bf16.mxu0 0
        %939 = vmatpush1.bf16.msra.mxu0 0
        %940 = vmatprep.mubr.bf16.mxu0 0
        %941 = vmatmul.mubr.bf16.gmra.mrb[0].mxu0 %v829
        %v942 = vpop.f32.mrb[0].mxu0
        %v943 = vadd.f32 %v858, %v942
        %v944 = vpop.f32.mrb[0].mxu0
        %v945 = vpop.f32.mrb[0].mxu0
        %v946 = vadd.f32 %v858, %v945
        %v947 = vpop.f32.mrb[0].mxu0
        %948 = vmatprep.mubr.bf16.mxu0 0
        %949 = vmatmul.mubr.bf16.gmra.mrb[0].mxu0 %v830
        %v950 = vpop.f32.mrb[0].mxu0
        %v951 = vadd.f32 %v858, %v950
        %v952 = vpop.f32.mrb[0].mxu0
        %v953 = vpop.f32.mrb[0].mxu0
        %v954 = vadd.f32 %v858, %v953
        %v955 = vpop.f32.mrb[0].mxu0
        %956 = vmatprep.mubr.bf16.mxu0 0
        %957 = vmatmul.mubr.bf16.gmra.mrb[0].mxu0 %v831
        %v958 = vpop.f32.mrb[0].mxu0
        %v959 = vadd.f32 %v858, %v958
        %v960 = vpop.f32.mrb[0].mxu0
        %v961 = vpop.f32.mrb[0].mxu0
        %v962 = vadd.f32 %v858, %v961
        %v963 = vpop.f32.mrb[0].mxu0
        %964 = vmatprep.mubr.bf16.mxu0 0
        %965 = vmatmul.mubr.bf16.gmra.mrb[0].mxu0 %v832
        %v966 = vpop.f32.mrb[0].mxu0
        %v967 = vadd.f32 %v858, %v966
        %v968 = vpop.f32.mrb[0].mxu0
        %v969 = vpop.f32.mrb[0].mxu0
        %v970 = vadd.f32 %v858, %v969
        %v971 = vpop.f32.mrb[0].mxu0
        %972 = vmatprep.mubr.bf16.mxu0 0
        %973 = vmatmul.mubr.bf16.gmra.mrb[0].mxu0 %v833
        %v974 = vpop.f32.mrb[0].mxu0
        %v975 = vadd.f32 %v858, %v974
        %v976 = vpop.f32.mrb[0].mxu0
        %v977 = vpop.f32.mrb[0].mxu0
        %v978 = vadd.f32 %v858, %v977
        %v979 = vpop.f32.mrb[0].mxu0
        %980 = vmatprep.mubr.bf16.mxu0 0
        %981 = vmatmul.mubr.bf16.gmra.mrb[0].mxu0 %v834
        %v982 = vpop.f32.mrb[0].mxu0
        %v983 = vadd.f32 %v858, %v982
        %v984 = vpop.f32.mrb[0].mxu0
        %v985 = vpop.f32.mrb[0].mxu0
        %v986 = vadd.f32 %v858, %v985
        %v987 = vpop.f32.mrb[0].mxu0
        %988 = vmatprep.mubr.bf16.mxu0 0
        %989 = vmatmul.mubr.bf16.gmra.mrb[0].mxu0 %v835
        %v990 = vpop.f32.mrb[0].mxu0
        %v991 = vadd.f32 %v858, %v990
        %v992 = vpop.f32.mrb[0].mxu0
        %v993 = vpop.f32.mrb[0].mxu0
        %v994 = vadd.f32 %v858, %v993
        %v995 = vpop.f32.mrb[0].mxu0
        %996 = vmatprep.mubr.bf16.mxu0 0
        %997 = vmatmul.mubr.bf16.gmra.mrb[0].mxu0 %v836
        %v998 = vpop.f32.mrb[0].mxu0
        %v999 = vadd.f32 %v858, %v998
        %v1000 = vpop.f32.mrb[0].mxu0
        %v1001 = vpop.f32.mrb[0].mxu0
        %v1002 = vadd.f32 %v858, %v1001
        %v1003 = vpop.f32.mrb[0].mxu0
        %1004 = vdwg.mxu0
        %v1005 = vmax.f32 %v943, 0.0
        %v1006 = vmax.f32 %v946, 0.0
        %v1007 = vmax.f32 %v951, 0.0
        %v1008 = vmax.f32 %v954, 0.0
        %v1009 = vmax.f32 %v959, 0.0
        %v1010 = vmax.f32 %v962, 0.0
        %v1011 = vmax.f32 %v967, 0.0
        %v1012 = vmax.f32 %v970, 0.0
        %v1013 = vmax.f32 %v975, 0.0
        %v1014 = vmax.f32 %v978, 0.0
        %v1015 = vmax.f32 %v983, 0.0
        %v1016 = vmax.f32 %v986, 0.0
        %v1017 = vmax.f32 %v991, 0.0
        %v1018 = vmax.f32 %v994, 0.0
        %v1019 = vmax.f32 %v999, 0.0
        %v1020 = vmax.f32 %v1002, 0.0
        %1021 = vst [vmem:[#allocation2] sm:$0xff] %v1005
        %1022 = vst [vmem:[#allocation2 + $0x8] sm:$0xff] %v1006
        %1023 = vst [vmem:[#allocation2 + $0x10] sm:$0xff] %v1007
        %1024 = vst [vmem:[#allocation2 + $0x18] sm:$0xff] %v1008
        %1025 = vst [vmem:[#allocation2 + $0x20] sm:$0xff] %v1009
        %1026 = vst [vmem:[#allocation2 + $0x28] sm:$0xff] %v1010
        %1027 = vst [vmem:[#allocation2 + $0x30] sm:$0xff] %v1011
        %1028 = vst [vmem:[#allocation2 + $0x38] sm:$0xff] %v1012
        %1029 = vst [vmem:[#allocation2 + $0x40] sm:$0xff] %v1013
        %1030 = vst [vmem:[#allocation2 + $0x48] sm:$0xff] %v1014
        %1031 = vst [vmem:[#allocation2 + $0x50] sm:$0xff] %v1015
        %1032 = vst [vmem:[#allocation2 + $0x58] sm:$0xff] %v1016
        %1033 = vst [vmem:[#allocation2 + $0x60] sm:$0xff] %v1017
        %1034 = vst [vmem:[#allocation2 + $0x68] sm:$0xff] %v1018
        %1035 = vst [vmem:[#allocation2 + $0x70] sm:$0xff] %v1019
        %1036 = vst [vmem:[#allocation2 + $0x78] sm:$0xff] %v1020
        %v1037 = vld [vmem:[%s2] sm:$0xf]
        %v1038 = vpack.c.bf16 %v1006, %v1005
        %v1039 = vpack.c.bf16 %v1008, %v1007
        %v1040 = vpack.c.bf16 %v1010, %v1009
        %v1041 = vpack.c.bf16 %v1012, %v1011
        %v1042 = vpack.c.bf16 %v1014, %v1013
        %v1043 = vpack.c.bf16 %v1016, %v1015
        %v1044 = vpack.c.bf16 %v1018, %v1017
        %v1045 = vpack.c.bf16 %v1020, %v1019
        %1046 = vmatprep.subr.bf16.mxu0 0
        %1047 = vmatpush1.bf16.msra.mxu0 %v1038
        %1048 = vmatprep.subr.bf16.mxu0 0
        %1049 = vmatpush1.bf16.msra.mxu0 %v1039
        %1050 = vmatprep.subr.bf16.mxu0 0
        %1051 = vmatpush1.bf16.msra.mxu0 %v1040
        %1052 = vmatprep.subr.bf16.mxu0 0
        %1053 = vmatpush1.bf16.msra.mxu0 %v1041
        %1054 = vmatprep.subr.bf16.mxu0 0
        %1055 = vmatpush1.bf16.msra.mxu0 %v1042
        %1056 = vmatprep.subr.bf16.mxu0 0
        %1057 = vmatpush1.bf16.msra.mxu0 %v1043
        %1058 = vmatprep.subr.bf16.mxu0 0
        %1059 = vmatpush1.bf16.msra.mxu0 %v1044
        %1060 = vmatprep.subr.bf16.mxu0 0
        %1061 = vmatpush1.bf16.msra.mxu0 %v1045
        %1062 = vmatprep.subr.bf16.mxu0 0
        %1063 = vmatpush1.bf16.msra.mxu0 0
        %1064 = vmatprep.subr.bf16.mxu0 0
        %1065 = vmatpush1.bf16.msra.mxu0 0
        %1066 = vmatprep.subr.bf16.mxu0 0
        %1067 = vmatpush1.bf16.msra.mxu0 0
        %1068 = vmatprep.subr.bf16.mxu0 0
        %1069 = vmatpush1.bf16.msra.mxu0 0
        %1070 = vmatprep.subr.bf16.mxu0 0
        %1071 = vmatpush1.bf16.msra.mxu0 0
        %1072 = vmatprep.subr.bf16.mxu0 0
        %1073 = vmatpush1.bf16.msra.mxu0 0
        %1074 = vmatprep.subr.bf16.mxu0 0
        %1075 = vmatpush1.bf16.msra.mxu0 0
        %1076 = vmatprep.subr.bf16.mxu0 0
        %1077 = vmatpush1.bf16.msra.mxu0 0
        %1078 = vmatprep.mubr.bf16.mxu0 0
        %1079 = vmatmul.mubr.bf16.gmra.mrb[0].mxu0 %v1037
        %v1080 = vpop.f32.mrb[0].mxu0
        %v1081 = vadd.f32 0.0, %v1080
        %v1082 = vpop.f32.mrb[0].mxu0
        %v1083 = vpop.f32.mrb[0].mxu0
        %v1084 = vpop.f32.mrb[0].mxu0
        %1085 = vdwg.mxu0
        %1086 = vst [vmem:[%s408] sm:$0xff] %v1081
        %p1087 = scmp.eq.s32.totalorder %s26, 2
        // Predicated region
        $region69: #{tpu_custom_call.1} parent=47 // pred_check
          %p1088 = pneg %p1087
        $region70: #{tpu_custom_call.1} parent=47 // pred_check_branch
          %1090 = sbr.rel (%p1088) target = $region72
        $region71: #{tpu_custom_call.1} parent=47 // pred_region
          %1091 = vst [vmem:[#allocation10] sm:$0xff] %v1005
          %1092 = vst [vmem:[#allocation10 + $0x8] sm:$0xff] %v1006
          %1093 = vst [vmem:[#allocation10 + $0x10] sm:$0xff] %v1007
          %1094 = vst [vmem:[#allocation10 + $0x18] sm:$0xff] %v1008
          %1095 = vst [vmem:[#allocation10 + $0x20] sm:$0xff] %v1009
          %1096 = vst [vmem:[#allocation10 + $0x28] sm:$0xff] %v1010
          %1097 = vst [vmem:[#allocation10 + $0x30] sm:$0xff] %v1011
          %1098 = vst [vmem:[#allocation10 + $0x38] sm:$0xff] %v1012
          %1099 = vst [vmem:[#allocation10 + $0x40] sm:$0xff] %v1013
          %1100 = vst [vmem:[#allocation10 + $0x48] sm:$0xff] %v1014
          %1101 = vst [vmem:[#allocation10 + $0x50] sm:$0xff] %v1015
          %1102 = vst [vmem:[#allocation10 + $0x58] sm:$0xff] %v1016
          %1103 = vst [vmem:[#allocation10 + $0x60] sm:$0xff] %v1017
          %1104 = vst [vmem:[#allocation10 + $0x68] sm:$0xff] %v1018
          %1105 = vst [vmem:[#allocation10 + $0x70] sm:$0xff] %v1019
          %1106 = vst [vmem:[#allocation10 + $0x78] sm:$0xff] %v1020
        $region72: #{tpu_custom_call.1} parent=47 // pred_fallthru
          _
        %s1107 = sand.u32 %s222, 1
        %s1108 = scalar_lea.sflag [#allocation12], %s1107
        %s1109 = sand.u32 %s222, 1
        %s1110 = smul.addr %s1109, 8
        %s1111 = scalar_lea.vmem [#allocation11], %s1110
        // Predicated region
        $region73: #{tpu_custom_call.1} parent=47 // pred_check
          %p1112 = pneg %p206
        $region74: #{tpu_custom_call.1} parent=47 // pred_check_branch
          %1114 = sbr.rel (%p1112) target = $region76
        $region75: #{tpu_custom_call.1} parent=47 // pred_region
          %s1116 = ssub.s32 2048, 2048
          %1117 = vsyncadd [#allocation5], %s1116
          %s1118 = sshll.u32 [#allocation10], 4
          %s1119 = int_to_ptr.vmem [resolvable:$true] %s1118
          %1124 = dma.vmem_to_hbm [thread:$0]  %s1119, 2048, %s7, [#allocation5], 128, 128, 8
        $region76: #{tpu_custom_call.1} parent=47 // pred_fallthru
          _
        // Predicated region
        $region77: #{tpu_custom_call.1} parent=47 // pred_check
          %p1125 = pneg %p232
        $region78: #{tpu_custom_call.1} parent=47 // pred_check_branch
          %1127 = sbr.rel (%p1125) target = $region80
        $region79: #{tpu_custom_call.1} parent=47 // pred_region
          %s1129 = ssub.s32 128, 128
          %1130 = vsyncadd %s1108, %s1129
          %s1131 = smul.addr %s26, 128
          %s1132 = scalar_lea.hbm %s8, %s1131
          %s1134 = sshll.u32 %s1111, 4
          %s1135 = int_to_ptr.vmem [resolvable:$true] %s1134
          %1137 = dma.vmem_to_hbm [thread:$0]  %s1135, 128, %s1132, %s1108
        $region80: #{tpu_custom_call.1} parent=47 // pred_fallthru
          _
        // Predicated region
        $region81: #{tpu_custom_call.1} parent=47 // pred_check
          %p1138 = pneg %p206
        $region82: #{tpu_custom_call.1} parent=47 // pred_check_branch
          %1140 = sbr.rel (%p1138) target = $region84
        $region83: #{tpu_custom_call.1} parent=47 // pred_region
          %1141 = dma.done [#allocation5], 2048
        $region84: #{tpu_custom_call.1} parent=47 // pred_fallthru
          _
      $region48: #{tpu_custom_call.1} parent=5 // pred_fallthru
        _
      %p1142 = scmp.le.s32.totalorder 2, %s21
      // Predicated region
      $region85: #{tpu_custom_call.1} parent=5 // pred_check
        %p1143 = pneg %p1142
      $region86: #{tpu_custom_call.1} parent=5 // pred_check_branch
        %1145 = sbr.rel (%p1143) target = $region88
      $region87: #{tpu_custom_call.1} parent=5 // pred_region
        %s1146 = ssub.s32 %s21, 2
        // Predicated region
        $region89: #{tpu_custom_call.1} parent=87 // pred_check
          %p1147 = pneg %p238
        $region90: #{tpu_custom_call.1} parent=87 // pred_check_branch
          %1149 = sbr.rel (%p1147) target = $region92
        $region91: #{tpu_custom_call.1} parent=87 // pred_region
          %s1150 = sand.u32 %s223, 1
          %s1151 = scalar_lea.sflag [#allocation12], %s1150
          %s1152 = sand.u32 %s223, 1
          %s1153 = smul.addr %s1152, 8
          %s1154 = scalar_lea.vmem [#allocation11], %s1153
          %1155 = dma.done %s1151, 128
        $region92: #{tpu_custom_call.1} parent=87 // pred_fallthru
          _
      $region88: #{tpu_custom_call.1} parent=5 // pred_fallthru
        _
    $region6: #{tpu_custom_call.1} parent=1 // loop_footer
      %s25 = sadd.s32 1, %s21
    $region7: #{tpu_custom_call.1} parent=1 // loop_footer_branch
      %20 = sbr.rel target = $region3
    $region8: #{tpu_custom_call.1} parent=1 // loop_exit
      _
    %1156 = vsyncpa [#allocation4], 1
    %s1157 = scalar_lea.sflag [#allocation4], 1
    %1158 = vsyncpa %s1157, 1
    %1159 = vsyncpa [#allocation7], 1
    %1160 = vsyncpa [#allocation5], 1
    %s1161 = scalar_lea.sflag [#allocation5], 1
    %1162 = vsyncpa %s1161, 1
    %1163 = vsyncpa [#allocation12], 1
    %s1164 = scalar_lea.sflag [#allocation12], 1
    %1165 = vsyncpa %s1164, 1

</llo_original>
